<compile_context>
chip_gen: v7x
topology: tpu7x:2x2x1
jax: 0.10.0
libtpu: 0.0.40
codegen_flags: <defaults>
</compile_context>

<pallas_src>
import functools

import jax
import jax.numpy as jnp
from jax.experimental import pallas as pl
from jax.experimental.pallas import tpu as pltpu

HIDDEN_DIM = 64          # MarketConditionEncoder hidden_dim
GROUP = 16               # hidden_dim // 4
LN_EPS = 1e-5            # PyTorch nn.LayerNorm default eps
MATMUL_DTYPE = jnp.float32   # set to jnp.bfloat16 to halve HBM read bytes
MAX_TB = 512             # batch tile (rows); multiple of 8, bounded VMEM on v7x


def _round_up(n, m):
    return ((n + m - 1) // m) * m


# ----------------------------------------------------------------------------
# Shared math helpers (pure jnp/lax -> usable both inside the kernel and in the
# pure-JAX reference).
# ----------------------------------------------------------------------------
def _ln(x, gamma, beta, eps=LN_EPS):
    mu = jnp.mean(x, axis=-1, keepdims=True)
    c = x - mu
    var = jnp.mean(c * c, axis=-1, keepdims=True)
    return c * jax.lax.rsqrt(var + eps) * gamma + beta


def _gelu_tanh(x):
    # TODO(synk): PyTorch nn.GELU() defaults to the exact erf form; the tanh
    # approximation used here (also used in the reference) differs by < ~3e-3.
    c = 0.7978845608028654  # sqrt(2/pi)
    return 0.5 * x * (1.0 + jnp.tanh(c * (x + 0.044715 * x * x * x)))


# ----------------------------------------------------------------------------
# In-kernel helpers.
# ----------------------------------------------------------------------------
def _softmax_k(x):
    """Stable softmax over the last dim; EUP approx reciprocal for the denom."""
    m = jnp.max(x, axis=-1, keepdims=True)
    e = jnp.exp(x - m)
    return e * pl.reciprocal(jnp.sum(e, axis=-1, keepdims=True), approx=True)


def _top_k_k(logits, k):
    """Top-k values/indices along the last dim (first-index tie break)."""
    num = logits.shape[-1]
    iota = jax.lax.broadcasted_iota(jnp.int32, logits.shape,
                                    logits.ndim - 1).astype(jnp.float32)
    vals, idxs = [], []
    cur = logits
    for _ in range(k):
        m = jnp.max(cur, axis=-1, keepdims=True)
        i = jnp.min(jnp.where(cur == m, iota, float(num)),
                    axis=-1, keepdims=True)
        vals.append(m)
        idxs.append(i)
        cur = jnp.where(iota == i, -jnp.inf, cur)
    return (jnp.concatenate(vals, axis=-1),
            jnp.concatenate(idxs, axis=-1).astype(jnp.int32))


def _dot(a, b):
    return jnp.dot(a.astype(MATMUL_DTYPE), b.astype(MATMUL_DTYPE),
                   preferred_element_type=jnp.float32)


# ----------------------------------------------------------------------------
# Fused gate kernel (one batch tile per grid step).
# ----------------------------------------------------------------------------
def _make_gate_kernel(market_aware, k, noise_std):
    def kernel(*refs):
        if market_aware:
            (x_ref, noise_ref,
             w1_ref, b1_ref, g1_ref, be1_ref,
             w2_ref, b2_ref, g2_ref, be2_ref,
             w3_ref, b3_ref,
             we_ref, bec_ref, gstat_ref, gbc_ref, eg_ref, eb_ref,
             wr1_ref, br1_ref, wr2_ref, br2_ref,
             wn1_ref, bn1_ref, wn2_ref, bn2_ref, spec_ref,
             tw_ref, ti_ref, gates_ref, feat_ref, probs_ref) = refs
        else:
            (x_ref, noise_ref,
             w1_ref, b1_ref, g1_ref, be1_ref,
             w2_ref, b2_ref, g2_ref, be2_ref,
             w3_ref, b3_ref,
             tw_ref, ti_ref, gates_ref) = refs

        x = x_ref[...]                                          # [TB, D]

        if market_aware:
            # --- MarketConditionEncoder: fused 4-branch Linear + ReLU -------
            h = _dot(x, we_ref[...]) + bec_ref[...]             # [TB, 64]
            h = jnp.maximum(h, 0.0)

            # --- per-branch LayerNorm, 2 MXU passes (review item 6) ---------
            hs = jnp.concatenate([h, h * h], axis=-1)           # [TB, 128]
            stats = jnp.dot(hs, gstat_ref[...],
                            preferred_element_type=jnp.float32)  # [TB, 8]
            bc = jnp.dot(stats, gbc_ref[...],
                         preferred_element_type=jnp.float32)     # [TB, 128]
            mean_f = bc[:, :HIDDEN_DIM]
            meansq_f = bc[:, HIDDEN_DIM:]
            var_f = jnp.maximum(meansq_f - mean_f * mean_f, 0.0)  # guard E[x^2]-m^2
            feat = ((h - mean_f) * jax.lax.rsqrt(var_f + LN_EPS)
                    * eg_ref[...] + eb_ref[...])                 # [TB, 64]

            # --- regime classifier + softmax --------------------------------
            r1 = jnp.maximum(_dot(feat, wr1_ref[...]) + br1_ref[...], 0.0)
            rlogits = _dot(r1, wr2_ref[...]) + br2_ref[...]      # [TB, 4]
            probs = _softmax_k(rlogits)

            # aux_info outputs (bf16 market_features writeback, review item 4)
            feat_ref[...] = feat.astype(feat_ref.dtype)
            probs_ref[...] = probs

            gate_in = jnp.concatenate([x, feat, probs], axis=-1)  # [TB, D+68]

            # adaptive noise scale: sigmoid MLP on regime probs
            n1 = jnp.maximum(_dot(probs, wn1_ref[...]) + bn1_ref[...], 0.0)
            n2 = _dot(n1, wn2_ref[...]) + bn2_ref[...]           # [TB, 1]
            noise_scale = noise_std / (1.0 + jnp.exp(-n2))
        else:
            gate_in = x
            noise_scale = noise_std                              # python scalar

        # --- gating network: Linear-LN-GELU x2 + Linear (Dropout = eval id) -
        z = _dot(gate_in, w1_ref[...]) + b1_ref[...]
        z = _gelu_tanh(_ln(z, g1_ref[...], be1_ref[...]))
        z = _dot(z, w2_ref[...]) + b2_ref[...]
        z = _gelu_tanh(_ln(z, g2_ref[...], be2_ref[...]))
        clean = _dot(z, w3_ref[...]) + b3_ref[...]               # [TB, E]
        if market_aware:
            clean = clean + _dot(probs, spec_ref[...])           # regime bias

        noisy = clean + noise_ref[...] * noise_scale

        vals, idxs = _top_k_k(noisy, k)
        tw_ref[...] = _softmax_k(vals)
        ti_ref[...] = idxs
        gates_ref[...] = _softmax_k(clean)                       # for aux loss

    return kernel


# ----------------------------------------------------------------------------
# pallas_call wrapper.
# ----------------------------------------------------------------------------
def _row_spec(shape, tb):
    return pl.BlockSpec((tb, shape[1]), lambda i: (i, 0))


def _const_spec(arr):
    return pl.BlockSpec(arr.shape, lambda i: (0, 0))


def _gate_pallas(xp, noisep, params, *, market_aware, k, noise_std, num_experts, tb):
    bp = xp.shape[0]
    gp = params["gating"]
    inputs = [xp, noisep,
              gp["w1"], gp["b1"], gp["ln1_g"], gp["ln1_b"],
              gp["w2"], gp["b2"], gp["ln2_g"], gp["ln2_b"],
              gp["w3"], gp["b3"]]
    if market_aware:
        ep = params["encoder"]
        inputs += [ep["w_enc"], ep["b_enc"], ep["g_stat"], ep["g_bcast"],
                   ep["ln_g"], ep["ln_b"],
                   ep["wr1"], ep["br1"], ep["wr2"], ep["br2"],
                   ep["wn1"], ep["bn1"], ep["wn2"], ep["bn2"],
                   params["spec_t"]]

    in_specs = ([_row_spec(xp.shape, tb), _row_spec(noisep.shape, tb)]
                + [_const_spec(a) for a in inputs[2:]])          # weights stay VMEM-resident

    out_shape = [jax.ShapeDtypeStruct((bp, k), jnp.float32),
                 jax.ShapeDtypeStruct((bp, k), jnp.int32),
                 jax.ShapeDtypeStruct((bp, num_experts), jnp.float32)]
    out_specs = [_row_spec((bp, k), tb), _row_spec((bp, k), tb),
                 _row_spec((bp, num_experts), tb)]
    if market_aware:
        out_shape += [jax.ShapeDtypeStruct((bp, HIDDEN_DIM), jnp.bfloat16),
                      jax.ShapeDtypeStruct((bp, 4), jnp.float32)]
        out_specs += [_row_spec((bp, HIDDEN_DIM), tb), _row_spec((bp, 4), tb)]

    return pl.pallas_call(
        _make_gate_kernel(market_aware, k, noise_std),
        out_shape=tuple(out_shape),
        grid=(bp // tb,),
        in_specs=in_specs,
        out_specs=tuple(out_specs),
        compiler_params=pltpu.CompilerParams(
            dimension_semantics=("parallel",)),   # dual-TC sharding on v7x
    )(*inputs)


@functools.partial(jax.jit,
                   static_argnames=("num_experts", "k", "noise_std", "market_aware"))
def financial_noisy_topk_gate(x, noise, params, *, num_experts, k=2,
                              noise_std=1.0, market_aware=False):
    """FinancialNoisyTopKGate.forward (eval mode).

    Returns (topk_weights [B,k], topk_idx [B,k], loss_aux scalar, aux_info dict).
    """
    if x.ndim == 3:
        x = x.reshape(x.shape[0], -1)
    elif x.ndim == 1:
        x = x[None, :]
    x = x.astype(jnp.float32)
    B = x.shape[0]
    E = num_experts

    # pad batch to a multiple of 8 / TB (review item 8), trim afterwards
    tb = min(MAX_TB, _round_up(B, 8))
    bp = _round_up(B, tb)
    xp = jnp.pad(x, ((0, bp - B), (0, 0)))
    noisep = jnp.pad(noise.astype(jnp.float32), ((0, bp - B), (0, 0)))

    outs = _gate_pallas(xp, noisep, params, market_aware=market_aware, k=k,
                        noise_std=noise_std, num_experts=E, tb=tb)
    if market_aware:
        tw, ti, gates, feat_bf16, probs = outs
    else:
        tw, ti, gates = outs
    tw, ti, gates = tw[:B], ti[:B], gates[:B]

    # auxiliary load-balance / importance loss (tiny O(B*E) glue in plain JAX)
    prob_expert = gates.mean(0)
    one_hot = jnp.zeros((B, E), jnp.float32)
    for j in range(k):
        one_hot = jnp.maximum(one_hot, jax.nn.one_hot(ti[:, j], E, dtype=jnp.float32))
    load_expert = one_hot.mean(0)
    load_loss = E * jnp.sum(prob_expert * load_expert)
    importance = gates.sum(0)
    importance_loss = jnp.var(importance, ddof=1) / jnp.mean(importance)
    loss_aux = 0.01 * load_loss + 0.01 * importance_loss

    aux = {}
    if market_aware:
        aux = {"regime_probs": probs[:B],
               "market_features": feat_bf16[:B].astype(jnp.float32)}
    return tw, ti, loss_aux, aux


def noisy_topk_gate(x, noise, params, *, num_experts, k=2, noise_std=1.0):
    """NoisyTopKGate.forward (market_aware=False): (topk_weights, topk_idx, loss_aux)."""
    tw, ti, loss, _ = financial_noisy_topk_gate(
        x, noise, params, num_experts=num_experts, k=k,
        noise_std=noise_std, market_aware=False)
    return tw, ti, loss


# ----------------------------------------------------------------------------
# Deterministic synthetic parameters (shapes match the nn.Modules; Linear
# weights stored transposed, i.e. [in, out]).
# ----------------------------------------------------------------------------
def init_gating_params(in_dim, num_experts, key):
    hid = in_dim * 2
    ks = jax.random.split(key, 7)
    w1 = 0.08 * jax.random.normal(ks[0], (in_dim, hid), jnp.float32)
    b1 = 0.05 * jax.random.normal(ks[1], (1, hid), jnp.float32)
    w2 = 0.08 * jax.random.normal(ks[2], (hid, in_dim), jnp.float32)
    b2 = 0.05 * jax.random.normal(ks[3], (1, in_dim), jnp.float32)
    w3 = 0.15 * jax.random.normal(ks[4], (in_dim, num_experts), jnp.float32)
    b3 = 0.05 * jax.random.normal(ks[5], (1, num_experts), jnp.float32)
    kg = jax.random.split(ks[6], 4)
    ln1_g = 1.0 + 0.02 * jax.random.normal(kg[0], (1, hid), jnp.float32)
    ln1_b = 0.02 * jax.random.normal(kg[1], (1, hid), jnp.float32)
    ln2_g = 1.0 + 0.02 * jax.random.normal(kg[2], (1, in_dim), jnp.float32)
    ln2_b = 0.02 * jax.random.normal(kg[3], (1, in_dim), jnp.float32)
    return dict(w1=w1, b1=b1, ln1_g=ln1_g, ln1_b=ln1_b,
                w2=w2, b2=b2, ln2_g=ln2_g, ln2_b=ln2_b, w3=w3, b3=b3)


def init_encoder_params(in_dim, key):
    ks = jax.random.split(key, 12)
    w_enc = 0.1 * jax.random.normal(ks[0], (in_dim, HIDDEN_DIM), jnp.float32)
    b_enc = 0.05 * jax.random.normal(ks[1], (1, HIDDEN_DIM), jnp.float32)
    ln_g = (1.0 + 0.02 * jax.random.normal(ks[2], (HIDDEN_DIM,), jnp.float32))[None, :]
    ln_b = (0.02 * jax.random.normal(ks[3], (HIDDEN_DIM,), jnp.float32))[None, :]

    # group-LN helper matrices (review item 6): stats matrix [128,8] producing
    # per-group mean / mean-of-squares from concat([h, h*h]) (1/16 folded in),
    # and broadcast matrix [8,128] mapping them back to per-feature lanes.
    gid = jnp.arange(HIDDEN_DIM) // GROUP                               # [64]
    ind = (gid[:, None] == jnp.arange(4)[None, :]).astype(jnp.float32)  # [64,4]
    zer = jnp.zeros_like(ind)
    g_stat = jnp.concatenate(
        [jnp.concatenate([ind, zer], axis=1),
         jnp.concatenate([zer, ind], axis=1)], axis=0) / float(GROUP)   # [128,8]
    g_bcast = jnp.concatenate(
        [jnp.concatenate([ind.T, zer.T], axis=1),
         jnp.concatenate([zer.T, ind.T], axis=1)], axis=0)              # [8,128]

    wr1 = 0.1 * jax.random.normal(ks[4], (HIDDEN_DIM, 32), jnp.float32)
    br1 = 0.05 * jax.random.normal(ks[5], (1, 32), jnp.float32)
    wr2 = 0.1 * jax.random.normal(ks[6], (32, 4), jnp.float32)
    br2 = 0.05 * jax.random.normal(ks[7], (1, 4), jnp.float32)

    wn1 = 0.4 * jax.random.normal(ks[8], (4, 16), jnp.float32)
    bn1 = 0.1 * jax.random.normal(ks[9], (1, 16), jnp.float32)
    wn2 = 0.4 * jax.random.normal(ks[10], (16, 1), jnp.float32)
    bn2 = 0.1 * jax.random.normal(ks[11], (1, 1), jnp.float32)
    return dict(w_enc=w_enc, b_enc=b_enc, g_stat=g_stat, g_bcast=g_bcast,
                ln_g=ln_g, ln_b=ln_b, wr1=wr1, br1=br1, wr2=wr2, br2=br2,
                wn1=wn1, bn1=bn1, wn2=wn2, bn2=bn2)


# ----------------------------------------------------------------------------
# Pure-JAX reference of the same forward pass (for the self-check).
# ----------------------------------------------------------------------------
def _encoder_ref(x, ep):
    h = jnp.maximum(x @ ep["w_enc"] + ep["b_enc"], 0.0)
    hg = h.reshape(h.shape[0], 4, GROUP)
    mu = hg.mean(-1, keepdims=True)
    var = ((hg - mu) ** 2).mean(-1, keepdims=True)
    normed = ((hg - mu) / jnp.sqrt(var + LN_EPS)).reshape(h.shape[0], HIDDEN_DIM)
    feat = normed * ep["ln_g"] + ep["ln_b"]
    r1 = jnp.maximum(feat @ ep["wr1"] + ep["br1"], 0.0)
    probs = jax.nn.softmax(r1 @ ep["wr2"] + ep["br2"], axis=-1)
    return feat, probs


def _gate_ref(x, noise, params, *, num_experts, k, noise_std, market_aware):
    if x.ndim == 3:
        x = x.reshape(x.shape[0], -1)
    x = x.astype(jnp.float32)
    B, E = x.shape[0], num_experts
    gp = params["gating"]
    if market_aware:
        ep = params["encoder"]
        feat, probs = _encoder_ref(x, ep)
        gate_in = jnp.concatenate([x, feat, probs], axis=1)
        n1 = jnp.maximum(probs @ ep["wn1"] + ep["bn1"], 0.0)
        noise_scale = jax.nn.sigmoid(n1 @ ep["wn2"] + ep["bn2"]) * noise_std
    else:
        gate_in = x
        noise_scale = noise_std
    z = _gelu_tanh(_ln(gate_in @ gp["w1"] + gp["b1"], gp["ln1_g"], gp["ln1_b"]))
    z = _gelu_tanh(_ln(z @ gp["w2"] + gp["b2"], gp["ln2_g"], gp["ln2_b"]))
    clean = z @ gp["w3"] + gp["b3"]
    if market_aware:
        clean = clean + probs @ params["spec_t"]
    noisy = clean + noise * noise_scale
    vals, idx = jax.lax.top_k(noisy, k)
    tw = jax.nn.softmax(vals, axis=-1)
    gates = jax.nn.softmax(clean, axis=-1)
    prob_expert = gates.mean(0)
    one_hot = jnp.zeros((B, E), jnp.float32)
    for j in range(k):
        one_hot = jnp.maximum(one_hot, jax.nn.one_hot(idx[:, j], E, dtype=jnp.float32))
    load_expert = one_hot.mean(0)
    load_loss = E * jnp.sum(prob_expert * load_expert)
    importance = gates.sum(0)
    importance_loss = jnp.var(importance, ddof=1) / jnp.mean(importance)
    loss = 0.01 * load_loss + 0.01 * importance_loss
    aux = {"regime_probs": probs, "market_features": feat} if market_aware else {}
    return tw, idx, loss, aux


# ----------------------------------------------------------------------------
if __name__ == "__main__":
    key = jax.random.PRNGKey(0)
    k_x, k_n, k_g, k_e, k_s, k_g2 = jax.random.split(key, 6)

    batch, seq, feat_dim = 2, 8, 16
    input_dim = seq * feat_dim              # gate flattens [B,S,F] -> [B, S*F]
    num_experts, topk = 8, 2

    x = jax.random.normal(k_x, (batch, seq, feat_dim), jnp.float32)
    noise = jax.random.normal(k_n, (batch, num_experts), jnp.float32)

    # ---------- NoisyTopKGate (the spec class: market_aware=False) ----------
    params_plain = {"gating": init_gating_params(input_dim, num_experts, k_g)}
    tw, ti, loss = noisy_topk_gate(x, noise, params_plain,
                                   num_experts=num_experts, k=topk)
    jax.block_until_ready((tw, ti, loss))

    rw, ri, rloss, _ = _gate_ref(x, noise, params_plain, num_experts=num_experts,
                                 k=topk, noise_std=1.0, market_aware=False)
    assert tw.shape == (batch, topk) and ti.shape == (batch, topk)
    assert jnp.array_equal(ti, ri)
    assert jnp.allclose(tw, rw, atol=2e-3, rtol=2e-3)
    assert jnp.allclose(jnp.sum(tw, axis=-1), 1.0, atol=2e-3)
    assert jnp.allclose(loss, rloss, atol=1e-4, rtol=2e-2)

    # ---------- FinancialNoisyTopKGate (market_aware=True) ------------------
    gating_dim = input_dim + HIDDEN_DIM + 4
    params_mkt = {
        "gating": init_gating_params(gating_dim, num_experts, k_g2),
        "encoder": init_encoder_params(input_dim, k_e),
        "spec_t": (0.1 * jax.random.normal(k_s, (num_experts, 4), jnp.float32)).T,
    }
    tw2, ti2, loss2, aux2 = financial_noisy_topk_gate(
        x, noise, params_mkt, num_experts=num_experts, k=topk, market_aware=True)
    jax.block_until_ready((tw2, ti2, loss2, aux2))

    rw2, ri2, rloss2, raux2 = _gate_ref(x, noise, params_mkt, num_experts=num_experts,
                                        k=topk, noise_std=1.0, market_aware=True)
    assert jnp.array_equal(ti2, ri2)
    assert jnp.allclose(tw2, rw2, atol=2e-3, rtol=2e-3)
    assert jnp.allclose(loss2, rloss2, atol=1e-4, rtol=2e-2)
    assert jnp.allclose(aux2["regime_probs"], raux2["regime_probs"], atol=2e-3)
    # market_features writeback is bf16 -> looser tolerance (review item 4)
    assert jnp.allclose(aux2["market_features"], raux2["market_features"],
                        atol=3e-2, rtol=3e-2)

    print("KERNEL_OK")
</pallas_src>

<mosaic_0001>
module attributes {stable_mosaic.version = 11 : i64} {
  func.func @kernel(%arg0: i32, %arg1: memref<8x128xf32, #tpu.memory_space<vmem>>, %arg2: memref<8x8xf32, #tpu.memory_space<vmem>>, %arg3: memref<128x256xf32, #tpu.memory_space<vmem>>, %arg4: memref<1x256xf32, #tpu.memory_space<vmem>>, %arg5: memref<1x256xf32, #tpu.memory_space<vmem>>, %arg6: memref<1x256xf32, #tpu.memory_space<vmem>>, %arg7: memref<256x128xf32, #tpu.memory_space<vmem>>, %arg8: memref<1x128xf32, #tpu.memory_space<vmem>>, %arg9: memref<1x128xf32, #tpu.memory_space<vmem>>, %arg10: memref<1x128xf32, #tpu.memory_space<vmem>>, %arg11: memref<128x8xf32, #tpu.memory_space<vmem>>, %arg12: memref<1x8xf32, #tpu.memory_space<vmem>>, %arg13: memref<8x2xf32, #tpu.memory_space<vmem>>, %arg14: memref<8x2xi32, #tpu.memory_space<vmem>>, %arg15: memref<8x8xf32, #tpu.memory_space<vmem>>) attributes {dimension_semantics = [#tpu.dimension_semantics<parallel>], iteration_bounds = array<i64: 1>, scalar_prefetch = 0 : i64, scratch_operands = 0 : i64, tpu.core_type = #tpu.core_type<tc>, window_params = [{transform_indices = @transform_0, window_bounds = array<i64: 8, 128>}, {transform_indices = @transform_1, window_bounds = array<i64: 8, 8>}, {pipeline_mode = #tpu.pipeline_mode<synchronous>, transform_indices = @transform_2, window_bounds = array<i64: 128, 256>}, {pipeline_mode = #tpu.pipeline_mode<synchronous>, transform_indices = @transform_3, window_bounds = array<i64: 1, 256>}, {pipeline_mode = #tpu.pipeline_mode<synchronous>, transform_indices = @transform_4, window_bounds = array<i64: 1, 256>}, {pipeline_mode = #tpu.pipeline_mode<synchronous>, transform_indices = @transform_5, window_bounds = array<i64: 1, 256>}, {pipeline_mode = #tpu.pipeline_mode<synchronous>, transform_indices = @transform_6, window_bounds = array<i64: 256, 128>}, {pipeline_mode = #tpu.pipeline_mode<synchronous>, transform_indices = @transform_7, window_bounds = array<i64: 1, 128>}, {pipeline_mode = #tpu.pipeline_mode<synchronous>, transform_indices = @transform_8, window_bounds = array<i64: 1, 128>}, {pipeline_mode = #tpu.pipeline_mode<synchronous>, transform_indices = @transform_9, window_bounds = array<i64: 1, 128>}, {pipeline_mode = #tpu.pipeline_mode<synchronous>, transform_indices = @transform_10, window_bounds = array<i64: 128, 8>}, {pipeline_mode = #tpu.pipeline_mode<synchronous>, transform_indices = @transform_11, window_bounds = array<i64: 1, 8>}, {transform_indices = @transform_12, window_bounds = array<i64: 8, 2>}, {transform_indices = @transform_13, window_bounds = array<i64: 8, 2>}, {transform_indices = @transform_14, window_bounds = array<i64: 8, 8>}]} {
    %c0 = arith.constant 0 : index
    %c0_0 = arith.constant 0 : index
    %0 = vector.load %arg1[%c0, %c0_0] : memref<8x128xf32, #tpu.memory_space<vmem>>, vector<8x128xf32>
    %c0_1 = arith.constant 0 : index
    %c0_2 = arith.constant 0 : index
    %1 = vector.load %arg3[%c0_1, %c0_2] : memref<128x256xf32, #tpu.memory_space<vmem>>, vector<128x256xf32>
    %cst = arith.constant dense<0.000000e+00> : vector<8x256xf32>
    %2 = tpu.matmul %0, %1, %cst {dimension_numbers = #tpu.dot_dimension_numbers<[1], [0], [0], [1], [0, 0, 1, 1], [], []>} : vector<8x128xf32>, vector<128x256xf32>, vector<8x256xf32> -> vector<8x256xf32>
    %c0_3 = arith.constant 0 : index
    %c0_4 = arith.constant 0 : index
    %3 = vector.load %arg4[%c0_3, %c0_4] : memref<1x256xf32, #tpu.memory_space<vmem>>, vector<1x256xf32>
    %4 = vector.broadcast %3 : vector<1x256xf32> to vector<8x256xf32>
    %5 = arith.addf %2, %4 : vector<8x256xf32>
    %c0_5 = arith.constant 0 : index
    %c0_6 = arith.constant 0 : index
    %6 = vector.load %arg5[%c0_5, %c0_6] : memref<1x256xf32, #tpu.memory_space<vmem>>, vector<1x256xf32>
    %c0_7 = arith.constant 0 : index
    %c0_8 = arith.constant 0 : index
    %7 = vector.load %arg6[%c0_7, %c0_8] : memref<1x256xf32, #tpu.memory_space<vmem>>, vector<1x256xf32>
    %cst_9 = arith.constant dense<0.000000e+00> : vector<8xf32>
    %8 = vector.multi_reduction <add>, %5, %cst_9 [1] : vector<8x256xf32> to vector<8xf32>
    %9 = vector.shape_cast %8 : vector<8xf32> to vector<8x1xf32>
    %cst_10 = arith.constant 2.560000e+02 : f32
    %10 = vector.broadcast %cst_10 : f32 to vector<8x1xf32>
    %11 = arith.divf %9, %10 : vector<8x1xf32>
    %12 = vector.broadcast %11 : vector<8x1xf32> to vector<8x256xf32>
    %13 = arith.subf %5, %12 : vector<8x256xf32>
    %14 = arith.mulf %13, %13 : vector<8x256xf32>
    %cst_11 = arith.constant dense<0.000000e+00> : vector<8xf32>
    %15 = vector.multi_reduction <add>, %14, %cst_11 [1] : vector<8x256xf32> to vector<8xf32>
    %16 = vector.shape_cast %15 : vector<8xf32> to vector<8x1xf32>
    %cst_12 = arith.constant 2.560000e+02 : f32
    %17 = vector.broadcast %cst_12 : f32 to vector<8x1xf32>
    %18 = arith.divf %16, %17 : vector<8x1xf32>
    %cst_13 = arith.constant 9.99999974E-6 : f32
    %19 = vector.broadcast %cst_13 : f32 to vector<8x1xf32>
    %20 = arith.addf %18, %19 : vector<8x1xf32>
    %21 = math.rsqrt %20 : vector<8x1xf32>
    %22 = vector.broadcast %21 : vector<8x1xf32> to vector<8x256xf32>
    %23 = arith.mulf %13, %22 : vector<8x256xf32>
    %24 = vector.broadcast %6 : vector<1x256xf32> to vector<8x256xf32>
    %25 = arith.mulf %23, %24 : vector<8x256xf32>
    %26 = vector.broadcast %7 : vector<1x256xf32> to vector<8x256xf32>
    %27 = arith.addf %25, %26 : vector<8x256xf32>
    %cst_14 = arith.constant 5.000000e-01 : f32
    %28 = vector.broadcast %cst_14 : f32 to vector<8x256xf32>
    %29 = arith.mulf %28, %27 : vector<8x256xf32>
    %cst_15 = arith.constant 4.471500e-02 : f32
    %30 = vector.broadcast %cst_15 : f32 to vector<8x256xf32>
    %31 = arith.mulf %30, %27 : vector<8x256xf32>
    %32 = arith.mulf %31, %27 : vector<8x256xf32>
    %33 = arith.mulf %32, %27 : vector<8x256xf32>
    %34 = arith.addf %27, %33 : vector<8x256xf32>
    %cst_16 = arith.constant 0.797884583 : f32
    %35 = vector.broadcast %cst_16 : f32 to vector<8x256xf32>
    %36 = arith.mulf %35, %34 : vector<8x256xf32>
    %37 = math.tanh %36 : vector<8x256xf32>
    %cst_17 = arith.constant 1.000000e+00 : f32
    %38 = vector.broadcast %cst_17 : f32 to vector<8x256xf32>
    %39 = arith.addf %38, %37 : vector<8x256xf32>
    %40 = arith.mulf %29, %39 : vector<8x256xf32>
    %c0_18 = arith.constant 0 : index
    %c0_19 = arith.constant 0 : index
    %41 = vector.load %arg7[%c0_18, %c0_19] : memref<256x128xf32, #tpu.memory_space<vmem>>, vector<256x128xf32>
    %cst_20 = arith.constant dense<0.000000e+00> : vector<8x128xf32>
    %42 = tpu.matmul %40, %41, %cst_20 {dimension_numbers = #tpu.dot_dimension_numbers<[1], [0], [0], [1], [0, 0, 1, 1], [], []>} : vector<8x256xf32>, vector<256x128xf32>, vector<8x128xf32> -> vector<8x128xf32>
    %c0_21 = arith.constant 0 : index
    %c0_22 = arith.constant 0 : index
    %43 = vector.load %arg8[%c0_21, %c0_22] : memref<1x128xf32, #tpu.memory_space<vmem>>, vector<1x128xf32>
    %44 = vector.broadcast %43 : vector<1x128xf32> to vector<8x128xf32>
    %45 = arith.addf %42, %44 : vector<8x128xf32>
    %c0_23 = arith.constant 0 : index
    %c0_24 = arith.constant 0 : index
    %46 = vector.load %arg9[%c0_23, %c0_24] : memref<1x128xf32, #tpu.memory_space<vmem>>, vector<1x128xf32>
    %c0_25 = arith.constant 0 : index
    %c0_26 = arith.constant 0 : index
    %47 = vector.load %arg10[%c0_25, %c0_26] : memref<1x128xf32, #tpu.memory_space<vmem>>, vector<1x128xf32>
    %cst_27 = arith.constant dense<0.000000e+00> : vector<8xf32>
    %48 = vector.multi_reduction <add>, %45, %cst_27 [1] : vector<8x128xf32> to vector<8xf32>
    %49 = vector.shape_cast %48 : vector<8xf32> to vector<8x1xf32>
    %cst_28 = arith.constant 1.280000e+02 : f32
    %50 = vector.broadcast %cst_28 : f32 to vector<8x1xf32>
    %51 = arith.divf %49, %50 : vector<8x1xf32>
    %52 = vector.broadcast %51 : vector<8x1xf32> to vector<8x128xf32>
    %53 = arith.subf %45, %52 : vector<8x128xf32>
    %54 = arith.mulf %53, %53 : vector<8x128xf32>
    %cst_29 = arith.constant dense<0.000000e+00> : vector<8xf32>
    %55 = vector.multi_reduction <add>, %54, %cst_29 [1] : vector<8x128xf32> to vector<8xf32>
    %56 = vector.shape_cast %55 : vector<8xf32> to vector<8x1xf32>
    %cst_30 = arith.constant 1.280000e+02 : f32
    %57 = vector.broadcast %cst_30 : f32 to vector<8x1xf32>
    %58 = arith.divf %56, %57 : vector<8x1xf32>
    %cst_31 = arith.constant 9.99999974E-6 : f32
    %59 = vector.broadcast %cst_31 : f32 to vector<8x1xf32>
    %60 = arith.addf %58, %59 : vector<8x1xf32>
    %61 = math.rsqrt %60 : vector<8x1xf32>
    %62 = vector.broadcast %61 : vector<8x1xf32> to vector<8x128xf32>
    %63 = arith.mulf %53, %62 : vector<8x128xf32>
    %64 = vector.broadcast %46 : vector<1x128xf32> to vector<8x128xf32>
    %65 = arith.mulf %63, %64 : vector<8x128xf32>
    %66 = vector.broadcast %47 : vector<1x128xf32> to vector<8x128xf32>
    %67 = arith.addf %65, %66 : vector<8x128xf32>
    %cst_32 = arith.constant 5.000000e-01 : f32
    %68 = vector.broadcast %cst_32 : f32 to vector<8x128xf32>
    %69 = arith.mulf %68, %67 : vector<8x128xf32>
    %cst_33 = arith.constant 4.471500e-02 : f32
    %70 = vector.broadcast %cst_33 : f32 to vector<8x128xf32>
    %71 = arith.mulf %70, %67 : vector<8x128xf32>
    %72 = arith.mulf %71, %67 : vector<8x128xf32>
    %73 = arith.mulf %72, %67 : vector<8x128xf32>
    %74 = arith.addf %67, %73 : vector<8x128xf32>
    %cst_34 = arith.constant 0.797884583 : f32
    %75 = vector.broadcast %cst_34 : f32 to vector<8x128xf32>
    %76 = arith.mulf %75, %74 : vector<8x128xf32>
    %77 = math.tanh %76 : vector<8x128xf32>
    %cst_35 = arith.constant 1.000000e+00 : f32
    %78 = vector.broadcast %cst_35 : f32 to vector<8x128xf32>
    %79 = arith.addf %78, %77 : vector<8x128xf32>
    %80 = arith.mulf %69, %79 : vector<8x128xf32>
    %c0_36 = arith.constant 0 : index
    %c0_37 = arith.constant 0 : index
    %81 = vector.load %arg11[%c0_36, %c0_37] : memref<128x8xf32, #tpu.memory_space<vmem>>, vector<128x8xf32>
    %cst_38 = arith.constant dense<0.000000e+00> : vector<8x8xf32>
    %82 = tpu.matmul %80, %81, %cst_38 {dimension_numbers = #tpu.dot_dimension_numbers<[1], [0], [0], [1], [0, 0, 1, 1], [], []>} : vector<8x128xf32>, vector<128x8xf32>, vector<8x8xf32> -> vector<8x8xf32>
    %c0_39 = arith.constant 0 : index
    %c0_40 = arith.constant 0 : index
    %83 = vector.load %arg12[%c0_39, %c0_40] : memref<1x8xf32, #tpu.memory_space<vmem>>, vector<1x8xf32>
    %84 = vector.broadcast %83 : vector<1x8xf32> to vector<8x8xf32>
    %85 = arith.addf %82, %84 : vector<8x8xf32>
    %c0_41 = arith.constant 0 : index
    %c0_42 = arith.constant 0 : index
    %86 = vector.load %arg2[%c0_41, %c0_42] : memref<8x8xf32, #tpu.memory_space<vmem>>, vector<8x8xf32>
    %cst_43 = arith.constant 1.000000e+00 : f32
    %87 = vector.broadcast %cst_43 : f32 to vector<8x8xf32>
    %88 = arith.mulf %86, %87 : vector<8x8xf32>
    %89 = arith.addf %85, %88 : vector<8x8xf32>
    %90 = tpu.iota {dimensions = array<i32: 1>} : vector<8x8xi32>
    %91 = arith.sitofp %90 : vector<8x8xi32> to vector<8x8xf32>
    %cst_44 = arith.constant dense<0xFF800000> : vector<8xf32>
    %92 = vector.multi_reduction <maximumf>, %89, %cst_44 [1] : vector<8x8xf32> to vector<8xf32>
    %93 = vector.shape_cast %92 : vector<8xf32> to vector<8x1xf32>
    %94 = vector.broadcast %93 : vector<8x1xf32> to vector<8x8xf32>
    %95 = arith.cmpf oeq, %89, %94 : vector<8x8xf32>
    %cst_45 = arith.constant 8.000000e+00 : f32
    %96 = vector.broadcast %cst_45 : f32 to vector<8x8xf32>
    %97 = arith.select %95, %91, %96 : vector<8x8xi1>, vector<8x8xf32>
    %cst_46 = arith.constant dense<0x7F800000> : vector<8xf32>
    %98 = vector.multi_reduction <minimumf>, %97, %cst_46 [1] : vector<8x8xf32> to vector<8xf32>
    %99 = vector.shape_cast %98 : vector<8xf32> to vector<8x1xf32>
    %100 = vector.broadcast %99 : vector<8x1xf32> to vector<8x8xf32>
    %101 = arith.cmpf oeq, %91, %100 : vector<8x8xf32>
    %cst_47 = arith.constant 0xFF800000 : f32
    %102 = vector.broadcast %cst_47 : f32 to vector<8x8xf32>
    %103 = arith.select %101, %102, %89 : vector<8x8xi1>, vector<8x8xf32>
    %cst_48 = arith.constant dense<0xFF800000> : vector<8xf32>
    %104 = vector.multi_reduction <maximumf>, %103, %cst_48 [1] : vector<8x8xf32> to vector<8xf32>
    %105 = vector.shape_cast %104 : vector<8xf32> to vector<8x1xf32>
    %106 = vector.broadcast %105 : vector<8x1xf32> to vector<8x8xf32>
    %107 = arith.cmpf oeq, %103, %106 : vector<8x8xf32>
    %cst_49 = arith.constant 8.000000e+00 : f32
    %108 = vector.broadcast %cst_49 : f32 to vector<8x8xf32>
    %109 = arith.select %107, %91, %108 : vector<8x8xi1>, vector<8x8xf32>
    %cst_50 = arith.constant dense<0x7F800000> : vector<8xf32>
    %110 = vector.multi_reduction <minimumf>, %109, %cst_50 [1] : vector<8x8xf32> to vector<8xf32>
    %111 = vector.shape_cast %110 : vector<8xf32> to vector<8x1xf32>
    %112 = tpu.concatenate %93, %105 in 1 : vector<8x1xf32>, vector<8x1xf32> -> vector<8x2xf32>
    %113 = tpu.concatenate %99, %111 in 1 : vector<8x1xf32>, vector<8x1xf32> -> vector<8x2xf32>
    %114 = arith.fptosi %113 : vector<8x2xf32> to vector<8x2xi32>
    %cst_51 = arith.constant dense<0xFF800000> : vector<8xf32>
    %115 = vector.multi_reduction <maximumf>, %112, %cst_51 [1] : vector<8x2xf32> to vector<8xf32>
    %116 = vector.shape_cast %115 : vector<8xf32> to vector<8x1xf32>
    %117 = vector.broadcast %116 : vector<8x1xf32> to vector<8x2xf32>
    %118 = arith.subf %112, %117 : vector<8x2xf32>
    %119 = math.exp %118 : vector<8x2xf32>
    %cst_52 = arith.constant dense<0.000000e+00> : vector<8xf32>
    %120 = vector.multi_reduction <add>, %119, %cst_52 [1] : vector<8x2xf32> to vector<8xf32>
    %121 = vector.shape_cast %120 : vector<8xf32> to vector<8x1xf32>
    %122 = tpu.reciprocal %121 {approx = true} : vector<8x1xf32> -> vector<8x1xf32>
    %123 = vector.broadcast %122 : vector<8x1xf32> to vector<8x2xf32>
    %124 = arith.mulf %119, %123 : vector<8x2xf32>
    %c0_53 = arith.constant 0 : index
    %c0_54 = arith.constant 0 : index
    %125 = vector.load %arg13[%c0_53, %c0_54] : memref<8x2xf32, #tpu.memory_space<vmem>>, vector<8x2xf32>
    tpu.vector_store %arg13[%c0_53, %c0_54], %124 {strides = array<i32>} : memref<8x2xf32, #tpu.memory_space<vmem>>, vector<8x2xf32>,
    %c0_55 = arith.constant 0 : index
    %c0_56 = arith.constant 0 : index
    %126 = vector.load %arg14[%c0_55, %c0_56] : memref<8x2xi32, #tpu.memory_space<vmem>>, vector<8x2xi32>
    tpu.vector_store %arg14[%c0_55, %c0_56], %114 {strides = array<i32>} : memref<8x2xi32, #tpu.memory_space<vmem>>, vector<8x2xi32>,
    %cst_57 = arith.constant dense<0xFF800000> : vector<8xf32>
    %127 = vector.multi_reduction <maximumf>, %85, %cst_57 [1] : vector<8x8xf32> to vector<8xf32>
    %128 = vector.shape_cast %127 : vector<8xf32> to vector<8x1xf32>
    %129 = vector.broadcast %128 : vector<8x1xf32> to vector<8x8xf32>
    %130 = arith.subf %85, %129 : vector<8x8xf32>
    %131 = math.exp %130 : vector<8x8xf32>
    %cst_58 = arith.constant dense<0.000000e+00> : vector<8xf32>
    %132 = vector.multi_reduction <add>, %131, %cst_58 [1] : vector<8x8xf32> to vector<8xf32>
    %133 = vector.shape_cast %132 : vector<8xf32> to vector<8x1xf32>
    %134 = tpu.reciprocal %133 {approx = true} : vector<8x1xf32> -> vector<8x1xf32>
    %135 = vector.broadcast %134 : vector<8x1xf32> to vector<8x8xf32>
    %136 = arith.mulf %131, %135 : vector<8x8xf32>
    %c0_59 = arith.constant 0 : index
    %c0_60 = arith.constant 0 : index
    %137 = vector.load %arg15[%c0_59, %c0_60] : memref<8x8xf32, #tpu.memory_space<vmem>>, vector<8x8xf32>
    tpu.vector_store %arg15[%c0_59, %c0_60], %136 {strides = array<i32>} : memref<8x8xf32, #tpu.memory_space<vmem>>, vector<8x8xf32>,
    return
  }
  func.func @transform_0(%arg0: i32) -> (i32, i32) {
    %c0_i32 = arith.constant 0 : i32
    %c0_i32_0 = arith.constant 0 : i32
    return %arg0, %c0_i32 : i32, i32
  }
  func.func @transform_1(%arg0: i32) -> (i32, i32) {
    %c0_i32 = arith.constant 0 : i32
    %c0_i32_0 = arith.constant 0 : i32
    return %arg0, %c0_i32 : i32, i32
  }
  func.func @transform_2(%arg0: i32) -> (i32, i32) {
    %c0_i32 = arith.constant 0 : i32
    %c0_i32_0 = arith.constant 0 : i32
    %c0_i32_1 = arith.constant 0 : i32
    return %c0_i32, %c0_i32_0 : i32, i32
  }
  func.func @transform_3(%arg0: i32) -> (i32, i32) {
    %c0_i32 = arith.constant 0 : i32
    %c0_i32_0 = arith.constant 0 : i32
    %c0_i32_1 = arith.constant 0 : i32
    return %c0_i32, %c0_i32_0 : i32, i32
  }
  func.func @transform_4(%arg0: i32) -> (i32, i32) {
    %c0_i32 = arith.constant 0 : i32
    %c0_i32_0 = arith.constant 0 : i32
    %c0_i32_1 = arith.constant 0 : i32
    return %c0_i32, %c0_i32_0 : i32, i32
  }
  func.func @transform_5(%arg0: i32) -> (i32, i32) {
    %c0_i32 = arith.constant 0 : i32
    %c0_i32_0 = arith.constant 0 : i32
    %c0_i32_1 = arith.constant 0 : i32
    return %c0_i32, %c0_i32_0 : i32, i32
  }
  func.func @transform_6(%arg0: i32) -> (i32, i32) {
    %c0_i32 = arith.constant 0 : i32
    %c0_i32_0 = arith.constant 0 : i32
    %c0_i32_1 = arith.constant 0 : i32
    return %c0_i32, %c0_i32_0 : i32, i32
  }
  func.func @transform_7(%arg0: i32) -> (i32, i32) {
    %c0_i32 = arith.constant 0 : i32
    %c0_i32_0 = arith.constant 0 : i32
    %c0_i32_1 = arith.constant 0 : i32
    return %c0_i32, %c0_i32_0 : i32, i32
  }
  func.func @transform_8(%arg0: i32) -> (i32, i32) {
    %c0_i32 = arith.constant 0 : i32
    %c0_i32_0 = arith.constant 0 : i32
    %c0_i32_1 = arith.constant 0 : i32
    return %c0_i32, %c0_i32_0 : i32, i32
  }
  func.func @transform_9(%arg0: i32) -> (i32, i32) {
    %c0_i32 = arith.constant 0 : i32
    %c0_i32_0 = arith.constant 0 : i32
    %c0_i32_1 = arith.constant 0 : i32
    return %c0_i32, %c0_i32_0 : i32, i32
  }
  func.func @transform_10(%arg0: i32) -> (i32, i32) {
    %c0_i32 = arith.constant 0 : i32
    %c0_i32_0 = arith.constant 0 : i32
    %c0_i32_1 = arith.constant 0 : i32
    return %c0_i32, %c0_i32_0 : i32, i32
  }
  func.func @transform_11(%arg0: i32) -> (i32, i32) {
    %c0_i32 = arith.constant 0 : i32
    %c0_i32_0 = arith.constant 0 : i32
    %c0_i32_1 = arith.constant 0 : i32
    return %c0_i32, %c0_i32_0 : i32, i32
  }
  func.func @transform_12(%arg0: i32) -> (i32, i32) {
    %c0_i32 = arith.constant 0 : i32
    %c0_i32_0 = arith.constant 0 : i32
    return %arg0, %c0_i32 : i32, i32
  }
  func.func @transform_13(%arg0: i32) -> (i32, i32) {
    %c0_i32 = arith.constant 0 : i32
    %c0_i32_0 = arith.constant 0 : i32
    return %arg0, %c0_i32 : i32, i32
  }
  func.func @transform_14(%arg0: i32) -> (i32, i32) {
    %c0_i32 = arith.constant 0 : i32
    %c0_i32_0 = arith.constant 0 : i32
    return %arg0, %c0_i32 : i32, i32
  }
}

</mosaic_0001>

<llo_original>
// kernel: financial_noisy_topk_gate.1
$region0: #{financial_noisy_topk_gate.1}
  #allocation0 [shape = 'u32[]', space=smem, size = 0x4, offset = 0x4, fixed_abs, tag = 'smem constant byte address 0x4 - core index']
  #allocation1 [shape = 'u32[144,128]{1,0:T(1,128)}', space=vmem, size = 0x12000, scoped, tag = 'internal scratch']
  %s0 = inlined_call_operand.vmem [shape: f32[8,128], index: 0, kind: input, shape index: {}]
  %s1 = inlined_call_operand.vmem [shape: f32[8,8], index: 1, kind: input, shape index: {}]
  %s2 = inlined_call_operand.hbm [shape: f32[128,256], index: 2, kind: input, shape index: {}]
  %s3 = inlined_call_operand.vmem [shape: f32[1,256], index: 3, kind: input, shape index: {}]
  %s4 = inlined_call_operand.vmem [shape: f32[1,256], index: 4, kind: input, shape index: {}]
  %s5 = inlined_call_operand.vmem [shape: f32[1,256], index: 5, kind: input, shape index: {}]
  %s6 = inlined_call_operand.hbm [shape: f32[256,128], index: 6, kind: input, shape index: {}]
  %s7 = inlined_call_operand.vmem [shape: f32[1,128], index: 7, kind: input, shape index: {}]
  %s8 = inlined_call_operand.vmem [shape: f32[1,128], index: 8, kind: input, shape index: {}]
  %s9 = inlined_call_operand.vmem [shape: f32[1,128], index: 9, kind: input, shape index: {}]
  %s10 = inlined_call_operand.vmem [shape: f32[128,8], index: 10, kind: input, shape index: {}]
  %s11 = inlined_call_operand.vmem [shape: f32[1,8], index: 11, kind: input, shape index: {}]
  %s12 = inlined_call_operand.vmem [shape: f32[8,2], index: 12, kind: output, shape index: {0}]
  %s13 = inlined_call_operand.vmem [shape: s32[8,2], index: 13, kind: output, shape index: {1}]
  %s14 = inlined_call_operand.vmem [shape: f32[8,8], index: 14, kind: output, shape index: {2}]
  %15 = xla_tuple %s12, %s13, %s14
  %s16 = sld [smem:[#allocation0]]
  $region82: #{financial_noisy_topk_gate.1} parent=0
    _
  %s18 = ssub.s32 1, %s16
  %s19 = scalar_select 0, %s18, %s16
  $region1: #{financial_noisy_topk_gate.1} parent=0
    #allocation2 [shape = 'u8[131072]{0}', space=vmem, size = 0x20000, scoped, tag = 'input window, operand 2, single buffered']
    #allocation3 [shape = 's32[1]{0}', space=sflag, size = 0x4, scoped, tag = 'scoped memory for financial_noisy_topk_gate.1']
    #allocation4 [shape = 'u8[131072]{0}', space=vmem, size = 0x20000, scoped, tag = 'input window, operand 6, single buffered']
    #allocation5 [shape = 's32[1]{0}', space=sflag, size = 0x4, scoped, tag = 'scoped memory for financial_noisy_topk_gate.1']
    %20 = vsyncpa [#allocation3], 0
    %21 = vsyncpa [#allocation5], 0
    // Predicated region
    $region2: #{financial_noisy_topk_gate.1} parent=1 // pred_check
      _
    $region3: #{financial_noisy_topk_gate.1} parent=1 // pred_check_branch
      %23 = sbr.rel (0) target = $region5
    $region4: #{financial_noisy_topk_gate.1} parent=1 // pred_region
      _
    $region5: #{financial_noisy_topk_gate.1} parent=1 // pred_fallthru
      _
    // Predicated region
    $region6: #{financial_noisy_topk_gate.1} parent=1 // pred_check
      _
    $region7: #{financial_noisy_topk_gate.1} parent=1 // pred_check_branch
      %25 = sbr.rel (0) target = $region9
    $region8: #{financial_noisy_topk_gate.1} parent=1 // pred_region
      _
    $region9: #{financial_noisy_topk_gate.1} parent=1 // pred_fallthru
      _
    // Predicated region
    $region10: #{financial_noisy_topk_gate.1} parent=1 // pred_check
      _
    $region11: #{financial_noisy_topk_gate.1} parent=1 // pred_check_branch
      %27 = sbr.rel (0) target = $region13
    $region12: #{financial_noisy_topk_gate.1} parent=1 // pred_region
      %s29 = ssub.s32 4096, 4096
      %30 = vsyncadd [#allocation3], %s29
      %s31 = sshll.u32 [#allocation2], 4
      %s32 = int_to_ptr.vmem [resolvable:$true] %s31
      %37 = dma.hbm_to_vmem [thread:$0]  %s2, 4096, %s32, [#allocation3], 256, 256, 16
    $region13: #{financial_noisy_topk_gate.1} parent=1 // pred_fallthru
      _
    // Predicated region
    $region14: #{financial_noisy_topk_gate.1} parent=1 // pred_check
      _
    $region15: #{financial_noisy_topk_gate.1} parent=1 // pred_check_branch
      %39 = sbr.rel (0) target = $region17
    $region16: #{financial_noisy_topk_gate.1} parent=1 // pred_region
      _
    $region17: #{financial_noisy_topk_gate.1} parent=1 // pred_fallthru
      _
    // Predicated region
    $region18: #{financial_noisy_topk_gate.1} parent=1 // pred_check
      _
    $region19: #{financial_noisy_topk_gate.1} parent=1 // pred_check_branch
      %41 = sbr.rel (0) target = $region21
    $region20: #{financial_noisy_topk_gate.1} parent=1 // pred_region
      _
    $region21: #{financial_noisy_topk_gate.1} parent=1 // pred_fallthru
      _
    // Predicated region
    $region22: #{financial_noisy_topk_gate.1} parent=1 // pred_check
      _
    $region23: #{financial_noisy_topk_gate.1} parent=1 // pred_check_branch
      %43 = sbr.rel (0) target = $region25
    $region24: #{financial_noisy_topk_gate.1} parent=1 // pred_region
      _
    $region25: #{financial_noisy_topk_gate.1} parent=1 // pred_fallthru
      _
    // Predicated region
    $region26: #{financial_noisy_topk_gate.1} parent=1 // pred_check
      _
    $region27: #{financial_noisy_topk_gate.1} parent=1 // pred_check_branch
      %45 = sbr.rel (0) target = $region29
    $region28: #{financial_noisy_topk_gate.1} parent=1 // pred_region
      %s47 = ssub.s32 4096, 4096
      %48 = vsyncadd [#allocation5], %s47
      %s49 = sshll.u32 [#allocation4], 4
      %s50 = int_to_ptr.vmem [resolvable:$true] %s49
      %55 = dma.hbm_to_vmem [thread:$0]  %s6, 4096, %s50, [#allocation5], 128, 128, 8
    $region29: #{financial_noisy_topk_gate.1} parent=1 // pred_fallthru
      _
    // Predicated region
    $region30: #{financial_noisy_topk_gate.1} parent=1 // pred_check
      _
    $region31: #{financial_noisy_topk_gate.1} parent=1 // pred_check_branch
      %57 = sbr.rel (0) target = $region33
    $region32: #{financial_noisy_topk_gate.1} parent=1 // pred_region
      _
    $region33: #{financial_noisy_topk_gate.1} parent=1 // pred_fallthru
      _
    // Predicated region
    $region34: #{financial_noisy_topk_gate.1} parent=1 // pred_check
      _
    $region35: #{financial_noisy_topk_gate.1} parent=1 // pred_check_branch
      %59 = sbr.rel (0) target = $region37
    $region36: #{financial_noisy_topk_gate.1} parent=1 // pred_region
      _
    $region37: #{financial_noisy_topk_gate.1} parent=1 // pred_fallthru
      _
    // Predicated region
    $region38: #{financial_noisy_topk_gate.1} parent=1 // pred_check
      _
    $region39: #{financial_noisy_topk_gate.1} parent=1 // pred_check_branch
      %61 = sbr.rel (0) target = $region41
    $region40: #{financial_noisy_topk_gate.1} parent=1 // pred_region
      _
    $region41: #{financial_noisy_topk_gate.1} parent=1 // pred_fallthru
      _
    // Predicated region
    $region42: #{financial_noisy_topk_gate.1} parent=1 // pred_check
      _
    $region43: #{financial_noisy_topk_gate.1} parent=1 // pred_check_branch
      %63 = sbr.rel (0) target = $region45
    $region44: #{financial_noisy_topk_gate.1} parent=1 // pred_region
      _
    $region45: #{financial_noisy_topk_gate.1} parent=1 // pred_fallthru
      _
    // Predicated region
    $region46: #{financial_noisy_topk_gate.1} parent=1 // pred_check
      _
    $region47: #{financial_noisy_topk_gate.1} parent=1 // pred_check_branch
      %65 = sbr.rel (0) target = $region49
    $region48: #{financial_noisy_topk_gate.1} parent=1 // pred_region
      _
    $region49: #{financial_noisy_topk_gate.1} parent=1 // pred_fallthru
      _
    // Predicated region
    $region50: #{financial_noisy_topk_gate.1} parent=1 // pred_check
      _
    $region51: #{financial_noisy_topk_gate.1} parent=1 // pred_check_branch
      %67 = sbr.rel (0) target = $region53
    $region52: #{financial_noisy_topk_gate.1} parent=1 // pred_region
      %68 = dma.done [#allocation3], 4096
    $region53: #{financial_noisy_topk_gate.1} parent=1 // pred_fallthru
      _
    // Predicated region
    $region54: #{financial_noisy_topk_gate.1} parent=1 // pred_check
      _
    $region55: #{financial_noisy_topk_gate.1} parent=1 // pred_check_branch
      %70 = sbr.rel (0) target = $region57
    $region56: #{financial_noisy_topk_gate.1} parent=1 // pred_region
      %71 = dma.done [#allocation5], 4096
    $region57: #{financial_noisy_topk_gate.1} parent=1 // pred_fallthru
      _
    %v72 = vld [vmem:[%s0] sm:$0xff]
    %v73 = vld [vmem:[#allocation2] sm:$0xff]
    %v74 = vld [vmem:[#allocation2 + $0x8] sm:$0xff]
    %v75 = vld [vmem:[#allocation2 + $0x10] sm:$0xff]
    %v76 = vld [vmem:[#allocation2 + $0x18] sm:$0xff]
    %v77 = vld [vmem:[#allocation2 + $0x20] sm:$0xff]
    %v78 = vld [vmem:[#allocation2 + $0x28] sm:$0xff]
    %v79 = vld [vmem:[#allocation2 + $0x30] sm:$0xff]
    %v80 = vld [vmem:[#allocation2 + $0x38] sm:$0xff]
    %v81 = vld [vmem:[#allocation2 + $0x40] sm:$0xff]
    %v82 = vld [vmem:[#allocation2 + $0x48] sm:$0xff]
    %v83 = vld [vmem:[#allocation2 + $0x50] sm:$0xff]
    %v84 = vld [vmem:[#allocation2 + $0x58] sm:$0xff]
    %v85 = vld [vmem:[#allocation2 + $0x60] sm:$0xff]
    %v86 = vld [vmem:[#allocation2 + $0x68] sm:$0xff]
    %v87 = vld [vmem:[#allocation2 + $0x70] sm:$0xff]
    %v88 = vld [vmem:[#allocation2 + $0x78] sm:$0xff]
    %v89 = vld [vmem:[#allocation2 + $0x80] sm:$0xff]
    %v90 = vld [vmem:[#allocation2 + $0x88] sm:$0xff]
    %v91 = vld [vmem:[#allocation2 + $0x90] sm:$0xff]
    %v92 = vld [vmem:[#allocation2 + $0x98] sm:$0xff]
    %v93 = vld [vmem:[#allocation2 + $0xa0] sm:$0xff]
    %v94 = vld [vmem:[#allocation2 + $0xa8] sm:$0xff]
    %v95 = vld [vmem:[#allocation2 + $0xb0] sm:$0xff]
    %v96 = vld [vmem:[#allocation2 + $0xb8] sm:$0xff]
    %v97 = vld [vmem:[#allocation2 + $0xc0] sm:$0xff]
    %v98 = vld [vmem:[#allocation2 + $0xc8] sm:$0xff]
    %v99 = vld [vmem:[#allocation2 + $0xd0] sm:$0xff]
    %v100 = vld [vmem:[#allocation2 + $0xd8] sm:$0xff]
    %v101 = vld [vmem:[#allocation2 + $0xe0] sm:$0xff]
    %v102 = vld [vmem:[#allocation2 + $0xe8] sm:$0xff]
    %v103 = vld [vmem:[#allocation2 + $0xf0] sm:$0xff]
    %v104 = vld [vmem:[#allocation2 + $0xf8] sm:$0xff]
    %v105 = vld [vmem:[%s3] sm:$0x3]
    %v107 = vlaneseq
    %v108 = vshrl.u32 %v107, 7
    %v109 = vsub.s32 0, %v108
    %v110 = vrot.slane %v105, %v109
    %v111 = vlaneseq
    %v112 = vshrl.u32 %v111, 7
    %v113 = vsub.s32 1, %v112
    %v114 = vrot.slane %v105, %v113
    %117 = vmatprep.subr.mxu0 %v74
    %118 = vmatpush1.msra.mxu0 %v73
    %119 = vmatprep.subr.mxu0 %v76
    %120 = vmatpush1.msra.mxu0 %v75
    %121 = vmatprep.subr.mxu0 %v78
    %122 = vmatpush1.msra.mxu0 %v77
    %123 = vmatprep.subr.mxu0 %v80
    %124 = vmatpush1.msra.mxu0 %v79
    %125 = vmatprep.subr.mxu0 %v82
    %126 = vmatpush1.msra.mxu0 %v81
    %127 = vmatprep.subr.mxu0 %v84
    %128 = vmatpush1.msra.mxu0 %v83
    %129 = vmatprep.subr.mxu0 %v86
    %130 = vmatpush1.msra.mxu0 %v85
    %131 = vmatprep.subr.mxu0 %v88
    %132 = vmatpush1.msra.mxu0 %v87
    %133 = vmatprep.subr.mxu0 %v90
    %134 = vmatpush1.msra.mxu0 %v89
    %135 = vmatprep.subr.mxu0 %v92
    %136 = vmatpush1.msra.mxu0 %v91
    %137 = vmatprep.subr.mxu0 %v94
    %138 = vmatpush1.msra.mxu0 %v93
    %139 = vmatprep.subr.mxu0 %v96
    %140 = vmatpush1.msra.mxu0 %v95
    %141 = vmatprep.subr.mxu0 %v98
    %142 = vmatpush1.msra.mxu0 %v97
    %143 = vmatprep.subr.mxu0 %v100
    %144 = vmatpush1.msra.mxu0 %v99
    %145 = vmatprep.subr.mxu0 %v102
    %146 = vmatpush1.msra.mxu0 %v101
    %147 = vmatprep.subr.mxu0 %v104
    %148 = vmatpush1.msra.mxu0 %v103
    %149 = vmatprep.subr.mxu0 0.0
    %150 = vmatpush1.msra.mxu0 0.0
    %151 = vmatprep.subr.mxu0 0.0
    %152 = vmatpush1.msra.mxu0 0.0
    %153 = vmatprep.subr.mxu0 0.0
    %154 = vmatpush1.msra.mxu0 0.0
    %155 = vmatprep.subr.mxu0 0.0
    %156 = vmatpush1.msra.mxu0 0.0
    %157 = vmatprep.subr.mxu0 0.0
    %158 = vmatpush1.msra.mxu0 0.0
    %159 = vmatprep.subr.mxu0 0.0
    %160 = vmatpush1.msra.mxu0 0.0
    %161 = vmatprep.subr.mxu0 0.0
    %162 = vmatpush1.msra.mxu0 0.0
    %163 = vmatprep.subr.mxu0 0.0
    %164 = vmatpush1.msra.mxu0 0.0
    %165 = vmatprep.subr.mxu0 0.0
    %166 = vmatpush1.msra.mxu0 0.0
    %167 = vmatprep.subr.mxu0 0.0
    %168 = vmatpush1.msra.mxu0 0.0
    %169 = vmatprep.subr.mxu0 0.0
    %170 = vmatpush1.msra.mxu0 0.0
    %171 = vmatprep.subr.mxu0 0.0
    %172 = vmatpush1.msra.mxu0 0.0
    %173 = vmatprep.subr.mxu0 0.0
    %174 = vmatpush1.msra.mxu0 0.0
    %175 = vmatprep.subr.mxu0 0.0
    %176 = vmatpush1.msra.mxu0 0.0
    %177 = vmatprep.subr.mxu0 0.0
    %178 = vmatpush1.msra.mxu0 0.0
    %179 = vmatprep.subr.mxu0 0.0
    %180 = vmatpush1.msra.mxu0 0.0
    %181 = vmatprep.mubr.f32.mxu0 0.0
    %182 = vmatmul.mubr.f32.gmra.mrb[0].mxu0 %v72
    %v183 = vpop.f32.mrb[0].mxu0
    %v184 = vadd.f32 %v110, %v183
    %v185 = vpop.f32.mrb[0].mxu0
    %v186 = vadd.f32 %v114, %v185
    %187 = vdwg.mxu0
    %v188 = vld [vmem:[%s4] sm:$0x3]
    %v189 = vld [vmem:[%s5] sm:$0x3]
    %v190 = vadd.f32 %v184, %v186
    %191 = vadd.xlane.f32.xlu0 %v190
    %v192 = vpop.xlane.xlu0 %191
    %v193 = vrcp.pop 256.0
    %v194 = vmul.f32 %v192, %v193
    %v195 = vsub.f32 %v184, %v194
    %v196 = vsub.f32 %v186, %v194
    %v197 = vmul.f32 %v195, %v195
    %v198 = vmul.f32 %v196, %v196
    %v199 = vadd.f32 %v197, %v198
    %200 = vadd.xlane.f32.xlu0 %v199
    %v201 = vpop.xlane.xlu0 %200
    %v202 = vmul.f32 %v201, %v193
    %v203 = vadd.f32 %v202, 1e-05
    %v204 = vrsqrt.pop %v203
    %v205 = vmul.f32 %v195, %v204
    %v206 = vmul.f32 %v196, %v204
    %v208 = vlaneseq
    %v209 = vshrl.u32 %v208, 7
    %v210 = vsub.s32 0, %v209
    %v211 = vrot.slane %v188, %v210
    %v212 = vlaneseq
    %v213 = vshrl.u32 %v212, 7
    %v214 = vsub.s32 1, %v213
    %v215 = vrot.slane %v188, %v214
    %v218 = vmul.f32 %v205, %v211
    %v219 = vmul.f32 %v206, %v215
    %v221 = vlaneseq
    %v222 = vshrl.u32 %v221, 7
    %v223 = vsub.s32 0, %v222
    %v224 = vrot.slane %v189, %v223
    %v225 = vlaneseq
    %v226 = vshrl.u32 %v225, 7
    %v227 = vsub.s32 1, %v226
    %v228 = vrot.slane %v189, %v227
    %v231 = vadd.f32 %v218, %v224
    %v232 = vadd.f32 %v219, %v228
    %v233 = vmul.f32 %v231, 0.5
    %v234 = vmul.f32 %v232, 0.5
    %v235 = vmul.f32 %v231, 0.044715
    %v236 = vmul.f32 %v232, 0.044715
    %v237 = vmul.f32 %v235, %v231
    %v238 = vmul.f32 %v236, %v232
    %v239 = vmul.f32 %v237, %v231
    %v240 = vmul.f32 %v238, %v232
    %v241 = vadd.f32 %v231, %v239
    %v242 = vadd.f32 %v232, %v240
    %v243 = vmul.f32 %v241, 0.7978846
    %v244 = vmul.f32 %v242, 0.7978846
    %v245 = vtanh.pop %v243
    %v246 = vtanh.pop %v244
    %v247 = vadd.f32 %v245, 1.0
    %v248 = vadd.f32 %v246, 1.0
    %v249 = vmul.f32 %v233, %v247
    %v250 = vmul.f32 %v234, %v248
    %v251 = vld [vmem:[#allocation4] sm:$0xff]
    %v252 = vld [vmem:[#allocation4 + $0x8] sm:$0xff]
    %v253 = vld [vmem:[#allocation4 + $0x10] sm:$0xff]
    %v254 = vld [vmem:[#allocation4 + $0x18] sm:$0xff]
    %v255 = vld [vmem:[#allocation4 + $0x20] sm:$0xff]
    %v256 = vld [vmem:[#allocation4 + $0x28] sm:$0xff]
    %v257 = vld [vmem:[#allocation4 + $0x30] sm:$0xff]
    %v258 = vld [vmem:[#allocation4 + $0x38] sm:$0xff]
    %v259 = vld [vmem:[#allocation4 + $0x40] sm:$0xff]
    %v260 = vld [vmem:[#allocation4 + $0x48] sm:$0xff]
    %v261 = vld [vmem:[#allocation4 + $0x50] sm:$0xff]
    %v262 = vld [vmem:[#allocation4 + $0x58] sm:$0xff]
    %v263 = vld [vmem:[#allocation4 + $0x60] sm:$0xff]
    %v264 = vld [vmem:[#allocation4 + $0x68] sm:$0xff]
    %v265 = vld [vmem:[#allocation4 + $0x70] sm:$0xff]
    %v266 = vld [vmem:[#allocation4 + $0x78] sm:$0xff]
    %v267 = vld [vmem:[#allocation4 + $0x80] sm:$0xff]
    %v268 = vld [vmem:[#allocation4 + $0x88] sm:$0xff]
    %v269 = vld [vmem:[#allocation4 + $0x90] sm:$0xff]
    %v270 = vld [vmem:[#allocation4 + $0x98] sm:$0xff]
    %v271 = vld [vmem:[#allocation4 + $0xa0] sm:$0xff]
    %v272 = vld [vmem:[#allocation4 + $0xa8] sm:$0xff]
    %v273 = vld [vmem:[#allocation4 + $0xb0] sm:$0xff]
    %v274 = vld [vmem:[#allocation4 + $0xb8] sm:$0xff]
    %v275 = vld [vmem:[#allocation4 + $0xc0] sm:$0xff]
    %v276 = vld [vmem:[#allocation4 + $0xc8] sm:$0xff]
    %v277 = vld [vmem:[#allocation4 + $0xd0] sm:$0xff]
    %v278 = vld [vmem:[#allocation4 + $0xd8] sm:$0xff]
    %v279 = vld [vmem:[#allocation4 + $0xe0] sm:$0xff]
    %v280 = vld [vmem:[#allocation4 + $0xe8] sm:$0xff]
    %v281 = vld [vmem:[#allocation4 + $0xf0] sm:$0xff]
    %v282 = vld [vmem:[#allocation4 + $0xf8] sm:$0xff]
    %v283 = vld [vmem:[%s7] sm:$0x1]
    %v285 = vlaneseq
    %v286 = vshrl.u32 %v285, 7
    %v287 = vsub.s32 0, %v286
    %v288 = vrot.slane %v283, %v287
    %290 = vmatprep.subr.mxu0 0.0
    %291 = vmatpush1.msra.mxu0 %v251
    %292 = vmatprep.subr.mxu0 0.0
    %293 = vmatpush1.msra.mxu0 %v252
    %294 = vmatprep.subr.mxu0 0.0
    %295 = vmatpush1.msra.mxu0 %v253
    %296 = vmatprep.subr.mxu0 0.0
    %297 = vmatpush1.msra.mxu0 %v254
    %298 = vmatprep.subr.mxu0 0.0
    %299 = vmatpush1.msra.mxu0 %v255
    %300 = vmatprep.subr.mxu0 0.0
    %301 = vmatpush1.msra.mxu0 %v256
    %302 = vmatprep.subr.mxu0 0.0
    %303 = vmatpush1.msra.mxu0 %v257
    %304 = vmatprep.subr.mxu0 0.0
    %305 = vmatpush1.msra.mxu0 %v258
    %306 = vmatprep.subr.mxu0 0.0
    %307 = vmatpush1.msra.mxu0 %v259
    %308 = vmatprep.subr.mxu0 0.0
    %309 = vmatpush1.msra.mxu0 %v260
    %310 = vmatprep.subr.mxu0 0.0
    %311 = vmatpush1.msra.mxu0 %v261
    %312 = vmatprep.subr.mxu0 0.0
    %313 = vmatpush1.msra.mxu0 %v262
    %314 = vmatprep.subr.mxu0 0.0
    %315 = vmatpush1.msra.mxu0 %v263
    %316 = vmatprep.subr.mxu0 0.0
    %317 = vmatpush1.msra.mxu0 %v264
    %318 = vmatprep.subr.mxu0 0.0
    %319 = vmatpush1.msra.mxu0 %v265
    %320 = vmatprep.subr.mxu0 0.0
    %321 = vmatpush1.msra.mxu0 %v266
    %322 = vmatprep.subr.mxu0 0.0
    %323 = vmatpush1.msra.mxu0 %v267
    %324 = vmatprep.subr.mxu0 0.0
    %325 = vmatpush1.msra.mxu0 %v268
    %326 = vmatprep.subr.mxu0 0.0
    %327 = vmatpush1.msra.mxu0 %v269
    %328 = vmatprep.subr.mxu0 0.0
    %329 = vmatpush1.msra.mxu0 %v270
    %330 = vmatprep.subr.mxu0 0.0
    %331 = vmatpush1.msra.mxu0 %v271
    %332 = vmatprep.subr.mxu0 0.0
    %333 = vmatpush1.msra.mxu0 %v272
    %334 = vmatprep.subr.mxu0 0.0
    %335 = vmatpush1.msra.mxu0 %v273
    %336 = vmatprep.subr.mxu0 0.0
    %337 = vmatpush1.msra.mxu0 %v274
    %338 = vmatprep.subr.mxu0 0.0
    %339 = vmatpush1.msra.mxu0 %v275
    %340 = vmatprep.subr.mxu0 0.0
    %341 = vmatpush1.msra.mxu0 %v276
    %342 = vmatprep.subr.mxu0 0.0
    %343 = vmatpush1.msra.mxu0 %v277
    %344 = vmatprep.subr.mxu0 0.0
    %345 = vmatpush1.msra.mxu0 %v278
    %346 = vmatprep.subr.mxu0 0.0
    %347 = vmatpush1.msra.mxu0 %v279
    %348 = vmatprep.subr.mxu0 0.0
    %349 = vmatpush1.msra.mxu0 %v280
    %350 = vmatprep.subr.mxu0 0.0
    %351 = vmatpush1.msra.mxu0 %v281
    %352 = vmatprep.subr.mxu0 0.0
    %353 = vmatpush1.msra.mxu0 %v282
    %354 = vmatprep.mubr.f32.mxu0 %v250
    %355 = vmatmul.mubr.f32.gmra.mrb[0].mxu0 %v249
    %v356 = vpop.f32.mrb[0].mxu0
    %v357 = vadd.f32 %v288, %v356
    %v358 = vpop.f32.mrb[0].mxu0
    %359 = vdwg.mxu0
    %v360 = vld [vmem:[%s8] sm:$0x1]
    %v361 = vld [vmem:[%s9] sm:$0x1]
    %362 = vadd.xlane.f32.xlu0 %v357
    %v363 = vpop.xlane.xlu0 %362
    %v364 = vrcp.pop 128.0
    %v365 = vmul.f32 %v363, %v364
    %v366 = vsub.f32 %v357, %v365
    %v367 = vmul.f32 %v366, %v366
    %368 = vadd.xlane.f32.xlu0 %v367
    %v369 = vpop.xlane.xlu0 %368
    %v370 = vmul.f32 %v369, %v364
    %v371 = vadd.f32 %v370, 1e-05
    %v372 = vrsqrt.pop %v371
    %v373 = vmul.f32 %v366, %v372
    %v375 = vlaneseq
    %v376 = vshrl.u32 %v375, 7
    %v377 = vsub.s32 0, %v376
    %v378 = vrot.slane %v360, %v377
    %v380 = vmul.f32 %v373, %v378
    %v382 = vlaneseq
    %v383 = vshrl.u32 %v382, 7
    %v384 = vsub.s32 0, %v383
    %v385 = vrot.slane %v361, %v384
    %v387 = vadd.f32 %v380, %v385
    %v388 = vmul.f32 %v387, 0.5
    %v389 = vmul.f32 %v387, 0.044715
    %v390 = vmul.f32 %v389, %v387
    %v391 = vmul.f32 %v390, %v387
    %v392 = vadd.f32 %v387, %v391
    %v393 = vmul.f32 %v392, 0.7978846
    %v394 = vtanh.pop %v393
    %v395 = vadd.f32 %v394, 1.0
    %v396 = vmul.f32 %v388, %v395
    %v397 = vld [vmem:[%s10] sm:$0xff]
    %v398 = vld [vmem:[%s10 + $0x8] sm:$0xff]
    %v399 = vld [vmem:[%s10 + $0x10] sm:$0xff]
    %v400 = vld [vmem:[%s10 + $0x18] sm:$0xff]
    %v401 = vld [vmem:[%s10 + $0x20] sm:$0xff]
    %v402 = vld [vmem:[%s10 + $0x28] sm:$0xff]
    %v403 = vld [vmem:[%s10 + $0x30] sm:$0xff]
    %v404 = vld [vmem:[%s10 + $0x38] sm:$0xff]
    %v405 = vld [vmem:[%s10 + $0x40] sm:$0xff]
    %v406 = vld [vmem:[%s10 + $0x48] sm:$0xff]
    %v407 = vld [vmem:[%s10 + $0x50] sm:$0xff]
    %v408 = vld [vmem:[%s10 + $0x58] sm:$0xff]
    %v409 = vld [vmem:[%s10 + $0x60] sm:$0xff]
    %v410 = vld [vmem:[%s10 + $0x68] sm:$0xff]
    %v411 = vld [vmem:[%s10 + $0x70] sm:$0xff]
    %v412 = vld [vmem:[%s10 + $0x78] sm:$0xff]
    %v413 = vld [vmem:[%s11] sm:$0x1]
    %v415 = vlaneseq
    %v416 = vshrl.u32 %v415, 7
    %v417 = vsub.s32 0, %v416
    %v418 = vrot.slane %v413, %v417
    %420 = vmatprep.subr.mxu0 0.0
    %421 = vmatpush1.msra.mxu0 %v397
    %422 = vmatprep.subr.mxu0 0.0
    %423 = vmatpush1.msra.mxu0 %v398
    %424 = vmatprep.subr.mxu0 0.0
    %425 = vmatpush1.msra.mxu0 %v399
    %426 = vmatprep.subr.mxu0 0.0
    %427 = vmatpush1.msra.mxu0 %v400
    %428 = vmatprep.subr.mxu0 0.0
    %429 = vmatpush1.msra.mxu0 %v401
    %430 = vmatprep.subr.mxu0 0.0
    %431 = vmatpush1.msra.mxu0 %v402
    %432 = vmatprep.subr.mxu0 0.0
    %433 = vmatpush1.msra.mxu0 %v403
    %434 = vmatprep.subr.mxu0 0.0
    %435 = vmatpush1.msra.mxu0 %v404
    %436 = vmatprep.subr.mxu0 0.0
    %437 = vmatpush1.msra.mxu0 %v405
    %438 = vmatprep.subr.mxu0 0.0
    %439 = vmatpush1.msra.mxu0 %v406
    %440 = vmatprep.subr.mxu0 0.0
    %441 = vmatpush1.msra.mxu0 %v407
    %442 = vmatprep.subr.mxu0 0.0
    %443 = vmatpush1.msra.mxu0 %v408
    %444 = vmatprep.subr.mxu0 0.0
    %445 = vmatpush1.msra.mxu0 %v409
    %446 = vmatprep.subr.mxu0 0.0
    %447 = vmatpush1.msra.mxu0 %v410
    %448 = vmatprep.subr.mxu0 0.0
    %449 = vmatpush1.msra.mxu0 %v411
    %450 = vmatprep.subr.mxu0 0.0
    %451 = vmatpush1.msra.mxu0 %v412
    %452 = vmatprep.subr.mxu0 0.0
    %453 = vmatpush1.msra.mxu0 0.0
    %454 = vmatprep.subr.mxu0 0.0
    %455 = vmatpush1.msra.mxu0 0.0
    %456 = vmatprep.subr.mxu0 0.0
    %457 = vmatpush1.msra.mxu0 0.0
    %458 = vmatprep.subr.mxu0 0.0
    %459 = vmatpush1.msra.mxu0 0.0
    %460 = vmatprep.subr.mxu0 0.0
    %461 = vmatpush1.msra.mxu0 0.0
    %462 = vmatprep.subr.mxu0 0.0
    %463 = vmatpush1.msra.mxu0 0.0
    %464 = vmatprep.subr.mxu0 0.0
    %465 = vmatpush1.msra.mxu0 0.0
    %466 = vmatprep.subr.mxu0 0.0
    %467 = vmatpush1.msra.mxu0 0.0
    %468 = vmatprep.subr.mxu0 0.0
    %469 = vmatpush1.msra.mxu0 0.0
    %470 = vmatprep.subr.mxu0 0.0
    %471 = vmatpush1.msra.mxu0 0.0
    %472 = vmatprep.subr.mxu0 0.0
    %473 = vmatpush1.msra.mxu0 0.0
    %474 = vmatprep.subr.mxu0 0.0
    %475 = vmatpush1.msra.mxu0 0.0
    %476 = vmatprep.subr.mxu0 0.0
    %477 = vmatpush1.msra.mxu0 0.0
    %478 = vmatprep.subr.mxu0 0.0
    %479 = vmatpush1.msra.mxu0 0.0
    %480 = vmatprep.subr.mxu0 0.0
    %481 = vmatpush1.msra.mxu0 0.0
    %482 = vmatprep.subr.mxu0 0.0
    %483 = vmatpush1.msra.mxu0 0.0
    %484 = vmatprep.mubr.f32.mxu0 0.0
    %485 = vmatmul.mubr.f32.gmra.mrb[0].mxu0 %v396
    %v486 = vpop.f32.mrb[0].mxu0
    %v487 = vadd.f32 %v418, %v486
    %v488 = vpop.f32.mrb[0].mxu0
    %489 = vdwg.mxu0
    %v490 = vld [vmem:[%s1] sm:$0xff]
    %v491 = vadd.f32 %v487, %v490
    %v492 = vlaneseq
    %v493 = vand.u32 %v492, 127
    %v494 = vcvt.s32.f32 %v493
    %vm495 = vcmask 64512
    %v496 = vsel %vm495, %v491, -inf
    %497 = vmax.xlane.f32.xlu0 %v496
    %v498 = vpop.xlane.xlu0 %497
    %vm499 = vcmp.eq.f32.partialorder %v491, %v498
    %v500 = vsel %vm499, %v494, 8.0
    %v501 = vsel %vm495, %v500, inf
    %502 = vmin.xlane.f32.xlu0 %v501
    %v503 = vpop.xlane.xlu0 %502
    %vm504 = vcmp.eq.f32.partialorder %v494, %v503
    %v505 = vsel %vm504, -inf, %v491
    %v506 = vsel %vm495, %v505, -inf
    %507 = vmax.xlane.f32.xlu0 %v506
    %v508 = vpop.xlane.xlu0 %507
    %vm509 = vcmp.eq.f32.partialorder %v505, %v508
    %v510 = vsel %vm509, %v494, 8.0
    %v511 = vsel %vm495, %v510, inf
    %512 = vmin.xlane.f32.xlu0 %v511
    %v513 = vpop.xlane.xlu0 %512
    %vm514 = vcmask 7168
    %v515 = vsel %vm514, %v498, %v508
    %v516 = vsel %vm514, %v503, %v513
    %v517 = vcvt.f32.s32.to.zero.pseudo %v516
    %vm518 = vcmask 15360
    %v519 = vsel %vm518, %v515, -inf
    %520 = vmax.xlane.f32.xlu0 %v519
    %v521 = vpop.xlane.xlu0 %520
    %v522 = vsub.f32 %v515, %v521
    %v523 = vmul.f32 %v522, 1.442695
    %v524 = vpow.pop %v523
    %v525 = vsel %vm518, %v524, 0.0
    %526 = vadd.xlane.f32.xlu0 %v525
    %v527 = vpop.xlane.xlu0 %526
    %v528 = vrcp.pop %v527
    %v529 = vmul.f32 %v524, %v528
    %530 = vst.msk [vmem:[%s12] sm:$0xff] %vm518, %v529
    %531 = vst.msk [vmem:[%s13] sm:$0xff] %vm518, %v517
    %v532 = vsel %vm495, %v487, -inf
    %533 = vmax.xlane.f32.xlu0 %v532
    %v534 = vpop.xlane.xlu0 %533
    %v535 = vsub.f32 %v487, %v534
    %v536 = vmul.f32 %v535, 1.442695
    %v537 = vpow.pop %v536
    %v538 = vsel %vm495, %v537, 0.0
    %539 = vadd.xlane.f32.xlu0 %v538
    %v540 = vpop.xlane.xlu0 %539
    %v541 = vrcp.pop %v540
    %v542 = vmul.f32 %v537, %v541
    %543 = vst.msk [vmem:[%s14] sm:$0xff] %vm495, %v542
    // Predicated region
    $region58: #{financial_noisy_topk_gate.1} parent=1 // pred_check
      _
    $region59: #{financial_noisy_topk_gate.1} parent=1 // pred_check_branch
      %545 = sbr.rel (0) target = $region61
    $region60: #{financial_noisy_topk_gate.1} parent=1 // pred_region
      _
    $region61: #{financial_noisy_topk_gate.1} parent=1 // pred_fallthru
      _
    // Predicated region
    $region62: #{financial_noisy_topk_gate.1} parent=1 // pred_check
      _
    $region63: #{financial_noisy_topk_gate.1} parent=1 // pred_check_branch
      %547 = sbr.rel (0) target = $region65
    $region64: #{financial_noisy_topk_gate.1} parent=1 // pred_region
      _
    $region65: #{financial_noisy_topk_gate.1} parent=1 // pred_fallthru
      _
    // Predicated region
    $region66: #{financial_noisy_topk_gate.1} parent=1 // pred_check
      _
    $region67: #{financial_noisy_topk_gate.1} parent=1 // pred_check_branch
      %549 = sbr.rel (0) target = $region69
    $region68: #{financial_noisy_topk_gate.1} parent=1 // pred_region
      _
    $region69: #{financial_noisy_topk_gate.1} parent=1 // pred_fallthru
      _
    // Predicated region
    $region70: #{financial_noisy_topk_gate.1} parent=1 // pred_check
      _
    $region71: #{financial_noisy_topk_gate.1} parent=1 // pred_check_branch
      %551 = sbr.rel (0) target = $region73
    $region72: #{financial_noisy_topk_gate.1} parent=1 // pred_region
      _
    $region73: #{financial_noisy_topk_gate.1} parent=1 // pred_fallthru
      _
    // Predicated region
    $region74: #{financial_noisy_topk_gate.1} parent=1 // pred_check
      _
    $region75: #{financial_noisy_topk_gate.1} parent=1 // pred_check_branch
      %553 = sbr.rel (0) target = $region77
    $region76: #{financial_noisy_topk_gate.1} parent=1 // pred_region
      _
    $region77: #{financial_noisy_topk_gate.1} parent=1 // pred_fallthru
      _
    // Predicated region
    $region78: #{financial_noisy_topk_gate.1} parent=1 // pred_check
      _
    $region79: #{financial_noisy_topk_gate.1} parent=1 // pred_check_branch
      %555 = sbr.rel (0) target = $region81
    $region80: #{financial_noisy_topk_gate.1} parent=1 // pred_region
      _
    $region81: #{financial_noisy_topk_gate.1} parent=1 // pred_fallthru
      _
    %556 = vsyncpa [#allocation3], 1
    %557 = vsyncpa [#allocation5], 1

</llo_original>
